<compile_context>
chip_gen: v6e
topology: v6e:2x2x1
jax: 0.10.0
libtpu: 0.0.40
codegen_flags: <defaults>
</compile_context>

<pallas_src>
import functools

import jax
import jax.numpy as jnp
import numpy as np
from jax.experimental import pallas as pl
from jax.experimental.pallas import tpu as pltpu


# ----------------------------- Pallas kernel -----------------------------

def _couple_deconv_kernel(xt_ref, w1t_ref, w2t_ref, out_ref):
    # xt_ref : (CK, TM)    active-patch im2col slab, patches on the lane axis (bf16/f32)
    # w1t_ref: (Cout, CK)  forward sparse-conv weight (transposed matrix form)
    # w2t_ref: (CK, Cout)  inverse sparse-conv weight (transposed matrix form)
    # out_ref: (CK, TM)    f32 inverse-conv output for every position of every active patch
    y_t = jnp.dot(w1t_ref[...], xt_ref[...],
                  preferred_element_type=jnp.float32)            # (Cout, TM) forward conv
    w2t = w2t_ref[...].astype(jnp.float32)                       # keep 2nd matmul in f32
    out_ref[...] = jnp.dot(w2t, y_t,
                           preferred_element_type=jnp.float32)   # (CK, TM) inverse conv


def couple_deconv_pallas(x_t, w1t, w2t, *, tm):
    CK, M = x_t.shape
    Cout = w1t.shape[0]
    assert tm % 128 == 0 and M % tm == 0, "lane tile must be lane-dense and divide M"
    grid = (M // tm,)
    return pl.pallas_call(
        _couple_deconv_kernel,
        out_shape=jax.ShapeDtypeStruct((CK, M), jnp.float32),
        grid_spec=pltpu.PrefetchScalarGridSpec(
            num_scalar_prefetch=0,
            grid=grid,
            in_specs=[
                pl.BlockSpec((CK, tm), lambda i: (0, i)),     # streamed, lane-dense
                pl.BlockSpec((Cout, CK), lambda i: (0, 0)),   # resident weights
                pl.BlockSpec((CK, Cout), lambda i: (0, 0)),
            ],
            out_specs=pl.BlockSpec((CK, tm), lambda i: (0, i)),
        ),
        compiler_params=pltpu.CompilerParams(
            dimension_semantics=("parallel",)),                # shards across TCs on v7x
    )(x_t, w1t, w2t)


# ----------------------------- JAX wrapper -----------------------------

@functools.partial(jax.jit, static_argnames=("batch_size", "shape", "kernel_size",
                                             "stride", "tm", "compute_dtype"))
def sparse_couple_deconv_forward(features, coors, batch_size, shape, w1, w2f,
                                 kernel_size, stride, tm=128,
                                 compute_dtype=jnp.bfloat16):
    """features: (N, Cin) f32; coors: (N, 4) int32 (b, z, y, x); shape = (D, H, W).
    w1 : (Cout, Cin, K, K, K) forward conv weight.
    w2f: (Cin, Cout, K, K, K) inverse conv weight.
    Returns dense (B, Cin, D, H, W) float32."""
    assert kernel_size == stride, "this implementation assumes kernel_size == stride"
    D, H, W = shape
    N, Cin = features.shape
    Cout = w1.shape[0]
    K = kernel_size
    K3 = K ** 3
    CK = Cin * K3
    Do, Ho, Wo = D // K, H // K, W // K

    b, zc, yc, xc = coors[:, 0], coors[:, 1], coors[:, 2], coors[:, 3]

    # ---- rulebook (XLA glue): active patch per voxel + within-patch offset ----
    patch_id = ((b * Do + zc // K) * Ho + yc // K) * Wo + xc // K        # (N,)
    off = ((zc % K) * K + (yc % K)) * K + (xc % K)                       # (N,) in [0, K^3)
    # Compact column slot per voxel's patch; padded unique slots are never referenced.
    _, slot = jnp.unique(patch_id, size=N, fill_value=batch_size * Do * Ho * Wo,
                         return_inverse=True)

    # Lanes = active patches, padded to a multiple of the lane tile.
    M_pad = max(tm, -(-N // tm) * tm)

    # Scatter the sparse features straight into the transposed, lane-dense im2col slab
    # (CK, M_pad): row = c*K^3 + offset, column = compact patch slot.
    r_ids = off[None, :] + (jnp.arange(Cin, dtype=jnp.int32) * K3)[:, None]    # (Cin, N)
    c_ids = jnp.broadcast_to(slot[None, :], (Cin, N))                          # (Cin, N)
    x_t = jnp.zeros((CK, M_pad), jnp.float32).at[r_ids, c_ids].set(features.T)
    x_t = x_t.astype(compute_dtype)

    # Weight matrices in the (c, kd, kh, kw) patch ordering, transposed for lanes=patches.
    w1t = w1.reshape(Cout, CK).astype(compute_dtype)                            # (Cout, CK)
    w2t = w2f.transpose(0, 2, 3, 4, 1).reshape(CK, Cout).astype(compute_dtype)  # (CK, Cout)

    out_t = couple_deconv_pallas(x_t, w1t, w2t, tm=tm)                          # (CK, M_pad) f32

    # Rulebook inversion == gather only the original active coordinates, then densify.
    out_feats = out_t[r_ids, c_ids]                                             # (Cin, N)
    dense = jnp.zeros((batch_size, Cin, D, H, W), jnp.float32)
    return dense.at[b, :, zc, yc, xc].set(out_feats.T)


# ----------------------------- pure-JAX reference -----------------------------

def reference_forward(features, coors, batch_size, shape, w1, w2f, k, s,
                      compute_dtype=jnp.bfloat16):
    # Round inputs to the kernel's compute dtype (math stays f32) so the comparison
    # validates the kernel structure rather than bf16-vs-f32 input rounding.
    features = features.astype(compute_dtype).astype(jnp.float32)
    w1 = w1.astype(compute_dtype).astype(jnp.float32)
    w2f = w2f.astype(compute_dtype).astype(jnp.float32)

    D, H, W = shape
    N, Cin = features.shape
    Cout = w1.shape[0]
    b, zc, yc, xc = coors[:, 0], coors[:, 1], coors[:, 2], coors[:, 3]

    x = jnp.zeros((batch_size, Cin, D, H, W), jnp.float32)
    x = x.at[b, :, zc, yc, xc].set(features)
    mask = jnp.zeros((batch_size, 1, D, H, W), jnp.float32)
    mask = mask.at[b, 0, zc, yc, xc].set(1.0)

    Do, Ho, Wo = (D - k) // s + 1, (H - k) // s + 1, (W - k) // s + 1
    y = jnp.zeros((batch_size, Cout, Do, Ho, Wo), jnp.float32)
    for kd in range(k):
        for kh in range(k):
            for kw in range(k):
                xs = x[:, :, kd:kd + s * Do:s, kh:kh + s * Ho:s, kw:kw + s * Wo:s]
                y = y + jnp.einsum('bcxyz,oc->boxyz', xs, w1[:, :, kd, kh, kw])
    z = jnp.zeros((batch_size, Cin, D, H, W), jnp.float32)
    for kd in range(k):
        for kh in range(k):
            for kw in range(k):
                upd = jnp.einsum('boxyz,co->bcxyz', y, w2f[:, :, kd, kh, kw])
                z = z.at[:, :, kd:kd + s * Do:s, kh:kh + s * Ho:s, kw:kw + s * Wo:s].add(upd)
    return z * mask


# ----------------------------- main -----------------------------

if __name__ == "__main__":
    key = jax.random.PRNGKey(0)
    k_coor, k_feat, k_w1, k_w2 = jax.random.split(key, 4)

    # Small shapes consistent with the module's forward:
    batch_size = 2
    shape = (8, 8, 8)          # (D, H, W)
    in_channels = 4
    out_channels = 8
    kernel_size = 2
    stride = 2
    n_active = 32              # number of active voxels

    D, H, W = shape

    # Deterministic unique active coordinates (b, z, y, x).
    flat = jax.random.choice(k_coor, batch_size * D * H * W, shape=(n_active,), replace=False)
    b_idx = flat // (D * H * W)
    rem = flat % (D * H * W)
    z_idx = rem // (H * W)
    y_idx = (rem // W) % H
    x_idx = rem % W
    coors = jnp.stack([b_idx, z_idx, y_idx, x_idx], axis=1).astype(jnp.int32)   # (N, 4)

    features = jax.random.normal(k_feat, (n_active, in_channels), jnp.float32)

    # Deterministic synthetic weights (no checkpoint load).
    w1 = jax.random.normal(
        k_w1, (out_channels, in_channels, kernel_size, kernel_size, kernel_size),
        jnp.float32) * 0.1
    w2f = jax.random.normal(
        k_w2, (in_channels, out_channels, kernel_size, kernel_size, kernel_size),
        jnp.float32) * 0.1

    out = sparse_couple_deconv_forward(features, coors, batch_size=batch_size, shape=shape,
                                       w1=w1, w2f=w2f, kernel_size=kernel_size, stride=stride)
    out = jax.block_until_ready(out)

    ref = jax.block_until_ready(
        reference_forward(features, coors, batch_size, shape, w1, w2f, kernel_size, stride))

    assert out.shape == (batch_size, in_channels, D, H, W)
    np.testing.assert_allclose(np.asarray(out), np.asarray(ref), rtol=1e-4, atol=1e-5)

    print("KERNEL_OK")
</pallas_src>

<mosaic_0001>
module attributes {stable_mosaic.version = 11 : i64} {
  func.func @_couple_deconv_kernel(%arg0: i32, %arg1: memref<32x128xbf16, #tpu.memory_space<vmem>>, %arg2: memref<8x32xbf16, #tpu.memory_space<vmem>>, %arg3: memref<32x8xbf16, #tpu.memory_space<vmem>>, %arg4: memref<32x128xf32, #tpu.memory_space<vmem>>) attributes {dimension_semantics = [#tpu.dimension_semantics<parallel>], iteration_bounds = array<i64: 1>, scalar_prefetch = 0 : i64, scratch_operands = 0 : i64, tpu.core_type = #tpu.core_type<tc>, window_params = [{transform_indices = @transform_0, window_bounds = array<i64: 32, 128>}, {pipeline_mode = #tpu.pipeline_mode<synchronous>, transform_indices = @transform_1, window_bounds = array<i64: 8, 32>}, {pipeline_mode = #tpu.pipeline_mode<synchronous>, transform_indices = @transform_2, window_bounds = array<i64: 32, 8>}, {transform_indices = @transform_3, window_bounds = array<i64: 32, 128>}]} {
    %c0 = arith.constant 0 : index
    %c0_0 = arith.constant 0 : index
    %0 = vector.load %arg2[%c0, %c0_0] : memref<8x32xbf16, #tpu.memory_space<vmem>>, vector<8x32xbf16>
    %c0_1 = arith.constant 0 : index
    %c0_2 = arith.constant 0 : index
    %1 = vector.load %arg1[%c0_1, %c0_2] : memref<32x128xbf16, #tpu.memory_space<vmem>>, vector<32x128xbf16>
    %cst = arith.constant dense<0.000000e+00> : vector<8x128xf32>
    %2 = tpu.matmul %0, %1, %cst {dimension_numbers = #tpu.dot_dimension_numbers<[1], [0], [0], [1], [0, 0, 1, 1], [], []>} : vector<8x32xbf16>, vector<32x128xbf16>, vector<8x128xf32> -> vector<8x128xf32>
    %c0_3 = arith.constant 0 : index
    %c0_4 = arith.constant 0 : index
    %3 = vector.load %arg3[%c0_3, %c0_4] : memref<32x8xbf16, #tpu.memory_space<vmem>>, vector<32x8xbf16>
    %4 = arith.extf %3 : vector<32x8xbf16> to vector<32x8xf32>
    %cst_5 = arith.constant dense<0.000000e+00> : vector<32x128xf32>
    %5 = tpu.matmul %4, %2, %cst_5 {dimension_numbers = #tpu.dot_dimension_numbers<[1], [0], [0], [1], [0, 0, 1, 1], [], []>} : vector<32x8xf32>, vector<8x128xf32>, vector<32x128xf32> -> vector<32x128xf32>
    %c0_6 = arith.constant 0 : index
    %c0_7 = arith.constant 0 : index
    %6 = vector.load %arg4[%c0_6, %c0_7] : memref<32x128xf32, #tpu.memory_space<vmem>>, vector<32x128xf32>
    tpu.vector_store %arg4[%c0_6, %c0_7], %5 {strides = array<i32>} : memref<32x128xf32, #tpu.memory_space<vmem>>, vector<32x128xf32>,
    return
  }
  func.func @transform_0(%arg0: i32) -> (i32, i32) {
    %c0_i32 = arith.constant 0 : i32
    %c0_i32_0 = arith.constant 0 : i32
    return %c0_i32, %arg0 : i32, i32
  }
  func.func @transform_1(%arg0: i32) -> (i32, i32) {
    %c0_i32 = arith.constant 0 : i32
    %c0_i32_0 = arith.constant 0 : i32
    %c0_i32_1 = arith.constant 0 : i32
    return %c0_i32, %c0_i32_0 : i32, i32
  }
  func.func @transform_2(%arg0: i32) -> (i32, i32) {
    %c0_i32 = arith.constant 0 : i32
    %c0_i32_0 = arith.constant 0 : i32
    %c0_i32_1 = arith.constant 0 : i32
    return %c0_i32, %c0_i32_0 : i32, i32
  }
  func.func @transform_3(%arg0: i32) -> (i32, i32) {
    %c0_i32 = arith.constant 0 : i32
    %c0_i32_0 = arith.constant 0 : i32
    return %c0_i32, %arg0 : i32, i32
  }
}

</mosaic_0001>

<llo_original>
// kernel: sparse_couple_deconv_forward.1
$region0: #{sparse_couple_deconv_forward.1}
  #allocation0 [shape = 'u32[]', space=smem, size = 0x4, offset = 0x4, fixed_abs, tag = 'smem constant byte address 0x4 - core index']
  #allocation1 [shape = 'u32[144,128]{1,0:T(1,128)}', space=vmem, size = 0x12000, scoped, tag = 'internal scratch']
  %s0 = inlined_call_operand.vmem [shape: bf16[32,128], index: 0, kind: input, shape index: {}]
  %s1 = inlined_call_operand.vmem [shape: bf16[8,32], index: 1, kind: input, shape index: {}]
  %s2 = inlined_call_operand.vmem [shape: bf16[32,8], index: 2, kind: input, shape index: {}]
  %s3 = inlined_call_operand.vmem [shape: f32[32,128], index: 3, kind: output, shape index: {}]
  %s4 = sld [smem:[#allocation0]]
  $region22: #{sparse_couple_deconv_forward.1} parent=0
    _
  %s6 = ssub.s32 1, %s4
  %s7 = scalar_select 0, %s6, %s4
  // Predicated region
  $region2: #{sparse_couple_deconv_forward.1} parent=0 // pred_check
    _
  $region3: #{sparse_couple_deconv_forward.1} parent=0 // pred_check_branch
    %9 = sbr.rel (0) target = $region5
  $region4: #{sparse_couple_deconv_forward.1} parent=0 // pred_region
    _
  $region5: #{sparse_couple_deconv_forward.1} parent=0 // pred_fallthru
    _
  // Predicated region
  $region6: #{sparse_couple_deconv_forward.1} parent=0 // pred_check
    _
  $region7: #{sparse_couple_deconv_forward.1} parent=0 // pred_check_branch
    %11 = sbr.rel (0) target = $region9
  $region8: #{sparse_couple_deconv_forward.1} parent=0 // pred_region
    _
  $region9: #{sparse_couple_deconv_forward.1} parent=0 // pred_fallthru
    _
  // Predicated region
  $region10: #{sparse_couple_deconv_forward.1} parent=0 // pred_check
    _
  $region11: #{sparse_couple_deconv_forward.1} parent=0 // pred_check_branch
    %13 = sbr.rel (0) target = $region13
  $region12: #{sparse_couple_deconv_forward.1} parent=0 // pred_region
    _
  $region13: #{sparse_couple_deconv_forward.1} parent=0 // pred_fallthru
    _
  %v15 = vld [vmem:[%s1] sm:$0xf]
  %v16 = vld [vmem:[%s0] sm:$0xf]
  %v17 = vld [vmem:[%s0 + $0x4] sm:$0xf]
  %v18 = vld [vmem:[%s0 + $0x8] sm:$0xf]
  %v19 = vld [vmem:[%s0 + $0xc] sm:$0xf]
  %v24 = vunpack.c.l.b16 %v16
  %v25 = vunpack.c.l.b16 %v17
  %v26 = vunpack.c.l.b16 %v18
  %v27 = vunpack.c.l.b16 %v19
  %v28 = vpack.c.b16 %v25, %v24
  %v29 = vpack.c.b16 %v27, %v26
  %vm32 = vcmask 261120
  %v34 = vsel %vm32, %v15, 0
  %36 = vmatprep.subr.bf16.mxu0 0
  %37 = vmatpush1.bf16.msra.mxu0 0
  %38 = vmatprep.subr.bf16.mxu0 0
  %39 = vmatpush1.bf16.msra.mxu0 0
  %40 = vmatprep.subr.bf16.mxu0 0
  %41 = vmatpush1.bf16.msra.mxu0 0
  %42 = vmatprep.subr.bf16.mxu0 0
  %43 = vmatpush1.bf16.msra.mxu0 0
  %44 = vmatprep.subr.bf16.mxu0 0
  %45 = vmatpush1.bf16.msra.mxu0 0
  %46 = vmatprep.subr.bf16.mxu0 0
  %47 = vmatpush1.bf16.msra.mxu0 0
  %48 = vmatprep.subr.bf16.mxu0 0
  %49 = vmatpush1.bf16.msra.mxu0 %v29
  %50 = vmatprep.subr.bf16.mxu0 0
  %51 = vmatpush1.bf16.msra.mxu0 %v28
  %52 = vmatprep.subr.bf16.mxu0 0
  %53 = vmatpush2.bf16.msra.mxu0 0
  %54 = vmatprep.subr.bf16.mxu0 0
  %55 = vmatpush2.bf16.msra.mxu0 0
  %56 = vmatprep.subr.bf16.mxu0 0
  %57 = vmatpush2.bf16.msra.mxu0 0
  %58 = vmatprep.subr.bf16.mxu0 0
  %59 = vmatpush2.bf16.msra.mxu0 0
  %60 = vmatprep.subr.bf16.mxu0 0
  %61 = vmatpush2.bf16.msra.mxu0 0
  %62 = vmatprep.subr.bf16.mxu0 0
  %63 = vmatpush2.bf16.msra.mxu0 0
  %64 = vmatprep.subr.bf16.mxu0 0
  %65 = vmatpush2.bf16.msra.mxu0 0
  %66 = vmatprep.subr.bf16.mxu0 0
  %67 = vmatpush2.bf16.msra.mxu0 0
  %68 = vmatprep.mubr.bf16.mxu0 0
  %69 = vmatmul.mubr.bf16.gmra.mxu0 %v34
  %v70 = vpop.f32.mrf.mxu0
  %v71 = vadd.f32 0.0, %v70
  %v72 = vpop.f32.mrf.mxu0
  %v73 = vpop.f32.mrf.mxu0
  %v74 = vpop.f32.mrf.mxu0
  %75 = vdwg.mxu0
  %v76 = vld [vmem:[%s2] sm:$0xf]
  %v77 = vld [vmem:[%s2 + $0x4] sm:$0xf]
  %v78 = vld [vmem:[%s2 + $0x8] sm:$0xf]
  %v79 = vld [vmem:[%s2 + $0xc] sm:$0xf]
  %v80 = vunpack.c.l.bf16 %v76
  %v81 = vunpack.c.l.bf16 %v77
  %v82 = vunpack.c.l.bf16 %v78
  %v83 = vunpack.c.l.bf16 %v79
  %vm84 = vcmask 64512
  %v86 = vsel %vm84, %v80, 0
  %v89 = vsel %vm84, %v81, 0
  %v92 = vsel %vm84, %v82, 0
  %v95 = vsel %vm84, %v83, 0
  %97 = vmatprep.subr.mxu0 0.0
  %98 = vmatpush1.msra.mxu0 0.0
  %99 = vmatprep.subr.mxu0 0.0
  %100 = vmatpush1.msra.mxu0 0.0
  %101 = vmatprep.subr.mxu0 0.0
  %102 = vmatpush1.msra.mxu0 0.0
  %103 = vmatprep.subr.mxu0 0.0
  %104 = vmatpush1.msra.mxu0 0.0
  %105 = vmatprep.subr.mxu0 0.0
  %106 = vmatpush1.msra.mxu0 0.0
  %107 = vmatprep.subr.mxu0 0.0
  %108 = vmatpush1.msra.mxu0 0.0
  %109 = vmatprep.subr.mxu0 0.0
  %110 = vmatpush1.msra.mxu0 0.0
  %111 = vmatprep.subr.mxu0 0.0
  %112 = vmatpush1.msra.mxu0 0.0
  %113 = vmatprep.subr.mxu0 0.0
  %114 = vmatpush1.msra.mxu0 0.0
  %115 = vmatprep.subr.mxu0 0.0
  %116 = vmatpush1.msra.mxu0 0.0
  %117 = vmatprep.subr.mxu0 0.0
  %118 = vmatpush1.msra.mxu0 0.0
  %119 = vmatprep.subr.mxu0 0.0
  %120 = vmatpush1.msra.mxu0 0.0
  %121 = vmatprep.subr.mxu0 0.0
  %122 = vmatpush1.msra.mxu0 0.0
  %123 = vmatprep.subr.mxu0 0.0
  %124 = vmatpush1.msra.mxu0 0.0
  %125 = vmatprep.subr.mxu0 0.0
  %126 = vmatpush1.msra.mxu0 0.0
  %127 = vmatprep.subr.mxu0 0.0
  %128 = vmatpush1.msra.mxu0 %v71
  %129 = vmatprep.subr.mxu0 0.0
  %130 = vmatpush2.msra.mxu0 0.0
  %131 = vmatprep.subr.mxu0 0.0
  %132 = vmatpush2.msra.mxu0 0.0
  %133 = vmatprep.subr.mxu0 0.0
  %134 = vmatpush2.msra.mxu0 0.0
  %135 = vmatprep.subr.mxu0 0.0
  %136 = vmatpush2.msra.mxu0 0.0
  %137 = vmatprep.subr.mxu0 0.0
  %138 = vmatpush2.msra.mxu0 0.0
  %139 = vmatprep.subr.mxu0 0.0
  %140 = vmatpush2.msra.mxu0 0.0
  %141 = vmatprep.subr.mxu0 0.0
  %142 = vmatpush2.msra.mxu0 0.0
  %143 = vmatprep.subr.mxu0 0.0
  %144 = vmatpush2.msra.mxu0 0.0
  %145 = vmatprep.subr.mxu0 0.0
  %146 = vmatpush2.msra.mxu0 0.0
  %147 = vmatprep.subr.mxu0 0.0
  %148 = vmatpush2.msra.mxu0 0.0
  %149 = vmatprep.subr.mxu0 0.0
  %150 = vmatpush2.msra.mxu0 0.0
  %151 = vmatprep.subr.mxu0 0.0
  %152 = vmatpush2.msra.mxu0 0.0
  %153 = vmatprep.subr.mxu0 0.0
  %154 = vmatpush2.msra.mxu0 0.0
  %155 = vmatprep.subr.mxu0 0.0
  %156 = vmatpush2.msra.mxu0 0.0
  %157 = vmatprep.subr.mxu0 0.0
  %158 = vmatpush2.msra.mxu0 0.0
  %159 = vmatprep.subr.mxu0 0.0
  %160 = vmatpush2.msra.mxu0 0.0
  %161 = vmatprep.mubr.f32.mxu0 0.0
  %162 = vmatmul.mubr.f32.gmra.mxu0 %v86
  %v163 = vpop.f32.mrf.mxu0
  %v164 = vadd.f32 0.0, %v163
  %v165 = vpop.f32.mrf.mxu0
  %166 = vmatprep.mubr.f32.mxu0 0.0
  %167 = vmatmul.mubr.f32.gmra.mxu0 %v89
  %v168 = vpop.f32.mrf.mxu0
  %v169 = vadd.f32 0.0, %v168
  %v170 = vpop.f32.mrf.mxu0
  %171 = vmatprep.mubr.f32.mxu0 0.0
  %172 = vmatmul.mubr.f32.gmra.mxu0 %v92
  %v173 = vpop.f32.mrf.mxu0
  %v174 = vadd.f32 0.0, %v173
  %v175 = vpop.f32.mrf.mxu0
  %176 = vmatprep.mubr.f32.mxu0 0.0
  %177 = vmatmul.mubr.f32.gmra.mxu0 %v95
  %v178 = vpop.f32.mrf.mxu0
  %v179 = vadd.f32 0.0, %v178
  %v180 = vpop.f32.mrf.mxu0
  %181 = vdwg.mxu0
  %182 = vst [vmem:[%s3] sm:$0xff] %v164
  %183 = vst [vmem:[%s3 + $0x8] sm:$0xff] %v169
  %184 = vst [vmem:[%s3 + $0x10] sm:$0xff] %v174
  %185 = vst [vmem:[%s3 + $0x18] sm:$0xff] %v179
  // Predicated region
  $region14: #{sparse_couple_deconv_forward.1} parent=0 // pred_check
    _
  $region15: #{sparse_couple_deconv_forward.1} parent=0 // pred_check_branch
    %187 = sbr.rel (0) target = $region17
  $region16: #{sparse_couple_deconv_forward.1} parent=0 // pred_region
    _
  $region17: #{sparse_couple_deconv_forward.1} parent=0 // pred_fallthru
    _
  // Predicated region
  $region18: #{sparse_couple_deconv_forward.1} parent=0 // pred_check
    _
  $region19: #{sparse_couple_deconv_forward.1} parent=0 // pred_check_branch
    %189 = sbr.rel (0) target = $region21
  $region20: #{sparse_couple_deconv_forward.1} parent=0 // pred_region
    _
  $region21: #{sparse_couple_deconv_forward.1} parent=0 // pred_fallthru
    _

</llo_original>
